<compile_context>
chip_gen: v7x
topology: tpu7x:2x2x1
jax: 0.10.0
libtpu: 0.0.40
codegen_flags: <defaults>
</compile_context>

<pallas_src>
import math
import jax
import jax.numpy as jnp
from jax.experimental import pallas as pl
from jax.experimental.pallas import tpu as pltpu


def _round_up(x, m):
    return ((x + m - 1) // m) * m


def _xavier_uniform(key, fan_in, fan_out, dtype=jnp.float32):
    # matches torch.nn.init.xavier_uniform_ (gain=1), stored as (in, out)
    limit = math.sqrt(6.0 / (fan_in + fan_out))
    return jax.random.uniform(key, (fan_in, fan_out), dtype=dtype,
                              minval=-limit, maxval=limit)


def init_params(key, num_state_history, num_states, num_actions):
    num_h1, num_latent = 256, 20
    num_h1_net, num_h2_net = 128, 128
    k = jax.random.split(key, 5)
    params = dict(
        w1=_xavier_uniform(k[0], num_state_history, num_h1),
        b1=jnp.zeros((1, num_h1), jnp.float32),
        w2=_xavier_uniform(k[1], num_h1, num_latent),
        b2=jnp.zeros((1, num_latent), jnp.float32),
        w3=_xavier_uniform(k[2], num_latent + num_states, num_h1_net),
        b3=jnp.zeros((1, num_h1_net), jnp.float32),
        w4=_xavier_uniform(k[3], num_h1_net, num_h2_net),
        b4=jnp.zeros((1, num_h2_net), jnp.float32),
        w5=_xavier_uniform(k[4], num_h2_net, num_actions),
        b5=jnp.zeros((1, num_actions), jnp.float32),
        log_std=jnp.zeros((num_actions,), jnp.float32),  # unused in forward
    )
    return params


def prepare_params(params, compute_dtype=jnp.bfloat16):
    """One-time weight padding / casting (hoisted out of the forward path).

    - W2/b2 columns padded to KP lanes so the latent lands directly in the
      128-lane "concat slab" (latent lanes [0, 20), zeros elsewhere).
    - W3 rows padded to KP so cat(latent, states) @ W3 becomes ONE MXU dot.
    - W5/b5 columns padded to AP (multiple of 128) for a lane-dense output store.
    - Weights in compute_dtype (bf16 on v6e/v7x); biases stay f32 (added to the
      f32 accumulator).
    """
    f32 = jnp.float32
    num_latent = params["w2"].shape[1]
    num_cat = params["w3"].shape[0]          # num_latent + num_states
    num_states = num_cat - num_latent
    num_actions = params["w5"].shape[1]
    KP = _round_up(num_cat, 128)             # padded concat / latent-slab width
    AP = _round_up(num_actions, 128)         # padded action-slab width

    w2_pad = jnp.zeros((params["w2"].shape[0], KP), f32).at[:, :num_latent].set(params["w2"])
    b2_pad = jnp.zeros((1, KP), f32).at[:, :num_latent].set(params["b2"])
    w3_pad = jnp.zeros((KP, params["w3"].shape[1]), f32).at[:num_cat, :].set(params["w3"])
    w5_pad = jnp.zeros((params["w5"].shape[0], AP), f32).at[:, :num_actions].set(params["w5"])
    b5_pad = jnp.zeros((1, AP), f32).at[:, :num_actions].set(params["b5"])

    return dict(
        w1=params["w1"].astype(compute_dtype), b1=params["b1"].astype(f32),
        w2=w2_pad.astype(compute_dtype),       b2=b2_pad.astype(f32),
        w3=w3_pad.astype(compute_dtype),       b3=params["b3"].astype(f32),
        w4=params["w4"].astype(compute_dtype), b4=params["b4"].astype(f32),
        w5=w5_pad.astype(compute_dtype),       b5=b5_pad.astype(f32),
        num_latent=num_latent, num_states=num_states, num_actions=num_actions,
        compute_dtype=compute_dtype,
    )


def _student_kernel(sh_ref, stp_ref,
                    w1_ref, b1_ref, w2_ref, b2_ref,
                    w3_ref, b3_ref, w4_ref, b4_ref, w5_ref, b5_ref,
                    pout_ref, plat_ref):
    f32 = jnp.float32
    cdt = sh_ref.dtype
    sh = sh_ref[...]           # (TB, H)        compute dtype
    stp = stp_ref[...]         # (TB, KP)       states pre-placed in lanes [20, 20+S)

    # policy_enc
    h1 = jnp.dot(sh, w1_ref[...], preferred_element_type=f32) + b1_ref[...]
    h1 = jnp.maximum(h1, 0.0).astype(cdt)
    # latent produced directly in the padded 128-lane slab (lanes >= 20 are exact zeros)
    lat = jnp.dot(h1, w2_ref[...], preferred_element_type=f32) + b2_ref[...]   # (TB, KP) f32
    plat_ref[...] = lat                                                        # lane-dense store

    # policy_net on cat((latent, states), dim=1):
    # disjoint-lane add builds the concat slab, then a SINGLE fused MXU pass.
    x = lat.astype(cdt) + stp
    h2 = jnp.dot(x, w3_ref[...], preferred_element_type=f32) + b3_ref[...]
    h2 = jnp.maximum(h2, 0.0).astype(cdt)
    h3 = jnp.dot(h2, w4_ref[...], preferred_element_type=f32) + b4_ref[...]
    h3 = jnp.maximum(h3, 0.0).astype(cdt)
    pout_ref[...] = jnp.dot(h3, w5_ref[...], preferred_element_type=f32) + b5_ref[...]


def student_forward(kp, state_history, states, *, block_batch=256):
    """Returns (p_out, p_latent) exactly like StudentNN.forward (batched path)."""
    B, H = state_history.shape
    S = states.shape[1]
    nl, na = kp["num_latent"], kp["num_actions"]
    cdt = kp["compute_dtype"]
    KP = kp["w3"].shape[0]
    AP = kp["w5"].shape[1]

    # Batch tile: multiple of 8 sublanes; 256 by default (matches v6e/v7x MXU width),
    # shrink for tiny batches so we don't DMA mostly padding.
    TB = min(block_batch, _round_up(B, 8))
    B_pad = _round_up(B, TB)
    n_blocks = B_pad // TB

    sh = state_history.astype(cdt)
    # Place states in lanes [nl, nl+S) of the KP-wide concat slab (zeros elsewhere).
    stp = jnp.zeros((B, KP), cdt).at[:, nl:nl + S].set(states.astype(cdt))
    if B_pad != B:
        sh = jnp.pad(sh, ((0, B_pad - B), (0, 0)))
        stp = jnp.pad(stp, ((0, B_pad - B), (0, 0)))

    def batch_spec(feat):
        return pl.BlockSpec((TB, feat), lambda i: (i, 0))

    def resident(arr):
        # weights/biases: same block every grid step -> stay VMEM-resident
        return pl.BlockSpec(arr.shape, lambda i: (0, 0))

    grid_spec = pltpu.PrefetchScalarGridSpec(
        num_scalar_prefetch=0,
        grid=(n_blocks,),
        in_specs=[
            batch_spec(H),
            batch_spec(KP),
            resident(kp["w1"]), resident(kp["b1"]),
            resident(kp["w2"]), resident(kp["b2"]),
            resident(kp["w3"]), resident(kp["b3"]),
            resident(kp["w4"]), resident(kp["b4"]),
            resident(kp["w5"]), resident(kp["b5"]),
        ],
        out_specs=(batch_spec(AP), batch_spec(KP)),
    )

    pout_pad, plat_pad = pl.pallas_call(
        _student_kernel,
        out_shape=(jax.ShapeDtypeStruct((B_pad, AP), jnp.float32),
                   jax.ShapeDtypeStruct((B_pad, KP), jnp.float32)),
        grid_spec=grid_spec,
        compiler_params=pltpu.CompilerParams(
            dimension_semantics=("parallel",),          # v7x: 2 TensorCores
            vmem_limit_bytes=32 * 1024 * 1024),         # safe on v5e/v6e/v7x
    )(sh, stp,
      kp["w1"], kp["b1"], kp["w2"], kp["b2"],
      kp["w3"], kp["b3"], kp["w4"], kp["b4"], kp["w5"], kp["b5"])

    # Strip batch + lane padding in the wrapper (free layout plumbing).
    return pout_pad[:B, :na], plat_pad[:B, :nl]


def _reference_forward(params, state_history, states):
    # plain-JAX reference for sanity check
    h1 = jnp.maximum(state_history @ params["w1"] + params["b1"], 0.0)
    lat = h1 @ params["w2"] + params["b2"]
    x = jnp.concatenate([lat, states], axis=1)
    h2 = jnp.maximum(x @ params["w3"] + params["b3"], 0.0)
    h3 = jnp.maximum(h2 @ params["w4"] + params["b4"], 0.0)
    return h3 @ params["w5"] + params["b5"], lat


if __name__ == "__main__":
    num_state_history = 32   # flattened state-history feature dim
    num_states = 16
    num_actions = 12
    batch = 8

    key = jax.random.PRNGKey(0)
    kparam, kstate, khist = jax.random.split(key, 3)
    params = init_params(kparam, num_state_history, num_states, num_actions)

    state_history = jax.random.normal(khist, (batch, num_state_history), jnp.float32)
    states = jax.random.normal(kstate, (batch, num_states), jnp.float32)

    ref_out, ref_lat = _reference_forward(params, state_history, states)

    # f32 compute path (v5e-friendly): tight check
    kparams_f32 = prepare_params(params, compute_dtype=jnp.float32)
    p_out, p_latent = student_forward(kparams_f32, state_history, states)
    p_out = jax.block_until_ready(p_out)
    p_latent = jax.block_until_ready(p_latent)
    assert p_out.shape == (batch, num_actions)
    assert p_latent.shape == (batch, 20)
    assert jnp.allclose(p_out, ref_out, atol=1e-4, rtol=1e-4)
    assert jnp.allclose(p_latent, ref_lat, atol=1e-4, rtol=1e-4)

    # bf16 compute path (v6e/v7x MXU fast path, f32 accumulation): loose check
    kparams_bf16 = prepare_params(params, compute_dtype=jnp.bfloat16)
    p_out16, p_lat16 = student_forward(kparams_bf16, state_history, states)
    p_out16 = jax.block_until_ready(p_out16)
    p_lat16 = jax.block_until_ready(p_lat16)
    assert jnp.allclose(p_out16, ref_out, atol=1e-1, rtol=1e-1)
    assert jnp.allclose(p_lat16, ref_lat, atol=1e-1, rtol=1e-1)

    # TODO(synk): _FilterAction / ActionFilterButter (scipy Butterworth IIR on host,
    # stateful numpy history) is outside forward() and has no Pallas hot path.
    print("KERNEL_OK")
</pallas_src>

<mosaic_0001>
module attributes {stable_mosaic.version = 11 : i64} {
  func.func @_student_kernel(%arg0: i32, %arg1: memref<8x32xf32, #tpu.memory_space<vmem>>, %arg2: memref<8x128xf32, #tpu.memory_space<vmem>>, %arg3: memref<32x256xf32, #tpu.memory_space<vmem>>, %arg4: memref<1x256xf32, #tpu.memory_space<vmem>>, %arg5: memref<256x128xf32, #tpu.memory_space<vmem>>, %arg6: memref<1x128xf32, #tpu.memory_space<vmem>>, %arg7: memref<128x128xf32, #tpu.memory_space<vmem>>, %arg8: memref<1x128xf32, #tpu.memory_space<vmem>>, %arg9: memref<128x128xf32, #tpu.memory_space<vmem>>, %arg10: memref<1x128xf32, #tpu.memory_space<vmem>>, %arg11: memref<128x128xf32, #tpu.memory_space<vmem>>, %arg12: memref<1x128xf32, #tpu.memory_space<vmem>>, %arg13: memref<8x128xf32, #tpu.memory_space<vmem>>, %arg14: memref<8x128xf32, #tpu.memory_space<vmem>>) attributes {dimension_semantics = [#tpu.dimension_semantics<parallel>], iteration_bounds = array<i64: 1>, scalar_prefetch = 0 : i64, scratch_operands = 0 : i64, tpu.core_type = #tpu.core_type<tc>, window_params = [{transform_indices = @transform_0, window_bounds = array<i64: 8, 32>}, {transform_indices = @transform_1, window_bounds = array<i64: 8, 128>}, {pipeline_mode = #tpu.pipeline_mode<synchronous>, transform_indices = @transform_2, window_bounds = array<i64: 32, 256>}, {pipeline_mode = #tpu.pipeline_mode<synchronous>, transform_indices = @transform_3, window_bounds = array<i64: 1, 256>}, {pipeline_mode = #tpu.pipeline_mode<synchronous>, transform_indices = @transform_4, window_bounds = array<i64: 256, 128>}, {pipeline_mode = #tpu.pipeline_mode<synchronous>, transform_indices = @transform_5, window_bounds = array<i64: 1, 128>}, {pipeline_mode = #tpu.pipeline_mode<synchronous>, transform_indices = @transform_6, window_bounds = array<i64: 128, 128>}, {pipeline_mode = #tpu.pipeline_mode<synchronous>, transform_indices = @transform_7, window_bounds = array<i64: 1, 128>}, {pipeline_mode = #tpu.pipeline_mode<synchronous>, transform_indices = @transform_8, window_bounds = array<i64: 128, 128>}, {pipeline_mode = #tpu.pipeline_mode<synchronous>, transform_indices = @transform_9, window_bounds = array<i64: 1, 128>}, {pipeline_mode = #tpu.pipeline_mode<synchronous>, transform_indices = @transform_10, window_bounds = array<i64: 128, 128>}, {pipeline_mode = #tpu.pipeline_mode<synchronous>, transform_indices = @transform_11, window_bounds = array<i64: 1, 128>}, {transform_indices = @transform_12, window_bounds = array<i64: 8, 128>}, {transform_indices = @transform_13, window_bounds = array<i64: 8, 128>}]} {
    %c0 = arith.constant 0 : index
    %c0_0 = arith.constant 0 : index
    %0 = vector.load %arg1[%c0, %c0_0] : memref<8x32xf32, #tpu.memory_space<vmem>>, vector<8x32xf32>
    %c0_1 = arith.constant 0 : index
    %c0_2 = arith.constant 0 : index
    %1 = vector.load %arg2[%c0_1, %c0_2] : memref<8x128xf32, #tpu.memory_space<vmem>>, vector<8x128xf32>
    %c0_3 = arith.constant 0 : index
    %c0_4 = arith.constant 0 : index
    %2 = vector.load %arg3[%c0_3, %c0_4] : memref<32x256xf32, #tpu.memory_space<vmem>>, vector<32x256xf32>
    %cst = arith.constant dense<0.000000e+00> : vector<8x256xf32>
    %3 = tpu.matmul %0, %2, %cst {dimension_numbers = #tpu.dot_dimension_numbers<[1], [0], [0], [1], [0, 0, 1, 1], [], []>} : vector<8x32xf32>, vector<32x256xf32>, vector<8x256xf32> -> vector<8x256xf32>
    %c0_5 = arith.constant 0 : index
    %c0_6 = arith.constant 0 : index
    %4 = vector.load %arg4[%c0_5, %c0_6] : memref<1x256xf32, #tpu.memory_space<vmem>>, vector<1x256xf32>
    %5 = vector.broadcast %4 : vector<1x256xf32> to vector<8x256xf32>
    %6 = arith.addf %3, %5 : vector<8x256xf32>
    %cst_7 = arith.constant 0.000000e+00 : f32
    %7 = vector.broadcast %cst_7 : f32 to vector<8x256xf32>
    %8 = arith.maximumf %6, %7 : vector<8x256xf32>
    %c0_8 = arith.constant 0 : index
    %c0_9 = arith.constant 0 : index
    %9 = vector.load %arg5[%c0_8, %c0_9] : memref<256x128xf32, #tpu.memory_space<vmem>>, vector<256x128xf32>
    %cst_10 = arith.constant dense<0.000000e+00> : vector<8x128xf32>
    %10 = tpu.matmul %8, %9, %cst_10 {dimension_numbers = #tpu.dot_dimension_numbers<[1], [0], [0], [1], [0, 0, 1, 1], [], []>} : vector<8x256xf32>, vector<256x128xf32>, vector<8x128xf32> -> vector<8x128xf32>
    %c0_11 = arith.constant 0 : index
    %c0_12 = arith.constant 0 : index
    %11 = vector.load %arg6[%c0_11, %c0_12] : memref<1x128xf32, #tpu.memory_space<vmem>>, vector<1x128xf32>
    %12 = vector.broadcast %11 : vector<1x128xf32> to vector<8x128xf32>
    %13 = arith.addf %10, %12 : vector<8x128xf32>
    %c0_13 = arith.constant 0 : index
    %c0_14 = arith.constant 0 : index
    %14 = vector.load %arg14[%c0_13, %c0_14] : memref<8x128xf32, #tpu.memory_space<vmem>>, vector<8x128xf32>
    tpu.vector_store %arg14[%c0_13, %c0_14], %13 {strides = array<i32>} : memref<8x128xf32, #tpu.memory_space<vmem>>, vector<8x128xf32>,
    %15 = arith.addf %13, %1 : vector<8x128xf32>
    %c0_15 = arith.constant 0 : index
    %c0_16 = arith.constant 0 : index
    %16 = vector.load %arg7[%c0_15, %c0_16] : memref<128x128xf32, #tpu.memory_space<vmem>>, vector<128x128xf32>
    %cst_17 = arith.constant dense<0.000000e+00> : vector<8x128xf32>
    %17 = tpu.matmul %15, %16, %cst_17 {dimension_numbers = #tpu.dot_dimension_numbers<[1], [0], [0], [1], [0, 0, 1, 1], [], []>} : vector<8x128xf32>, vector<128x128xf32>, vector<8x128xf32> -> vector<8x128xf32>
    %c0_18 = arith.constant 0 : index
    %c0_19 = arith.constant 0 : index
    %18 = vector.load %arg8[%c0_18, %c0_19] : memref<1x128xf32, #tpu.memory_space<vmem>>, vector<1x128xf32>
    %19 = vector.broadcast %18 : vector<1x128xf32> to vector<8x128xf32>
    %20 = arith.addf %17, %19 : vector<8x128xf32>
    %cst_20 = arith.constant 0.000000e+00 : f32
    %21 = vector.broadcast %cst_20 : f32 to vector<8x128xf32>
    %22 = arith.maximumf %20, %21 : vector<8x128xf32>
    %c0_21 = arith.constant 0 : index
    %c0_22 = arith.constant 0 : index
    %23 = vector.load %arg9[%c0_21, %c0_22] : memref<128x128xf32, #tpu.memory_space<vmem>>, vector<128x128xf32>
    %cst_23 = arith.constant dense<0.000000e+00> : vector<8x128xf32>
    %24 = tpu.matmul %22, %23, %cst_23 {dimension_numbers = #tpu.dot_dimension_numbers<[1], [0], [0], [1], [0, 0, 1, 1], [], []>} : vector<8x128xf32>, vector<128x128xf32>, vector<8x128xf32> -> vector<8x128xf32>
    %c0_24 = arith.constant 0 : index
    %c0_25 = arith.constant 0 : index
    %25 = vector.load %arg10[%c0_24, %c0_25] : memref<1x128xf32, #tpu.memory_space<vmem>>, vector<1x128xf32>
    %26 = vector.broadcast %25 : vector<1x128xf32> to vector<8x128xf32>
    %27 = arith.addf %24, %26 : vector<8x128xf32>
    %cst_26 = arith.constant 0.000000e+00 : f32
    %28 = vector.broadcast %cst_26 : f32 to vector<8x128xf32>
    %29 = arith.maximumf %27, %28 : vector<8x128xf32>
    %c0_27 = arith.constant 0 : index
    %c0_28 = arith.constant 0 : index
    %30 = vector.load %arg11[%c0_27, %c0_28] : memref<128x128xf32, #tpu.memory_space<vmem>>, vector<128x128xf32>
    %cst_29 = arith.constant dense<0.000000e+00> : vector<8x128xf32>
    %31 = tpu.matmul %29, %30, %cst_29 {dimension_numbers = #tpu.dot_dimension_numbers<[1], [0], [0], [1], [0, 0, 1, 1], [], []>} : vector<8x128xf32>, vector<128x128xf32>, vector<8x128xf32> -> vector<8x128xf32>
    %c0_30 = arith.constant 0 : index
    %c0_31 = arith.constant 0 : index
    %32 = vector.load %arg12[%c0_30, %c0_31] : memref<1x128xf32, #tpu.memory_space<vmem>>, vector<1x128xf32>
    %33 = vector.broadcast %32 : vector<1x128xf32> to vector<8x128xf32>
    %34 = arith.addf %31, %33 : vector<8x128xf32>
    %c0_32 = arith.constant 0 : index
    %c0_33 = arith.constant 0 : index
    %35 = vector.load %arg13[%c0_32, %c0_33] : memref<8x128xf32, #tpu.memory_space<vmem>>, vector<8x128xf32>
    tpu.vector_store %arg13[%c0_32, %c0_33], %34 {strides = array<i32>} : memref<8x128xf32, #tpu.memory_space<vmem>>, vector<8x128xf32>,
    return
  }
  func.func @transform_0(%arg0: i32) -> (i32, i32) {
    %c0_i32 = arith.constant 0 : i32
    %c0_i32_0 = arith.constant 0 : i32
    return %arg0, %c0_i32 : i32, i32
  }
  func.func @transform_1(%arg0: i32) -> (i32, i32) {
    %c0_i32 = arith.constant 0 : i32
    %c0_i32_0 = arith.constant 0 : i32
    return %arg0, %c0_i32 : i32, i32
  }
  func.func @transform_2(%arg0: i32) -> (i32, i32) {
    %c0_i32 = arith.constant 0 : i32
    %c0_i32_0 = arith.constant 0 : i32
    %c0_i32_1 = arith.constant 0 : i32
    return %c0_i32, %c0_i32_0 : i32, i32
  }
  func.func @transform_3(%arg0: i32) -> (i32, i32) {
    %c0_i32 = arith.constant 0 : i32
    %c0_i32_0 = arith.constant 0 : i32
    %c0_i32_1 = arith.constant 0 : i32
    return %c0_i32, %c0_i32_0 : i32, i32
  }
  func.func @transform_4(%arg0: i32) -> (i32, i32) {
    %c0_i32 = arith.constant 0 : i32
    %c0_i32_0 = arith.constant 0 : i32
    %c0_i32_1 = arith.constant 0 : i32
    return %c0_i32, %c0_i32_0 : i32, i32
  }
  func.func @transform_5(%arg0: i32) -> (i32, i32) {
    %c0_i32 = arith.constant 0 : i32
    %c0_i32_0 = arith.constant 0 : i32
    %c0_i32_1 = arith.constant 0 : i32
    return %c0_i32, %c0_i32_0 : i32, i32
  }
  func.func @transform_6(%arg0: i32) -> (i32, i32) {
    %c0_i32 = arith.constant 0 : i32
    %c0_i32_0 = arith.constant 0 : i32
    %c0_i32_1 = arith.constant 0 : i32
    return %c0_i32, %c0_i32_0 : i32, i32
  }
  func.func @transform_7(%arg0: i32) -> (i32, i32) {
    %c0_i32 = arith.constant 0 : i32
    %c0_i32_0 = arith.constant 0 : i32
    %c0_i32_1 = arith.constant 0 : i32
    return %c0_i32, %c0_i32_0 : i32, i32
  }
  func.func @transform_8(%arg0: i32) -> (i32, i32) {
    %c0_i32 = arith.constant 0 : i32
    %c0_i32_0 = arith.constant 0 : i32
    %c0_i32_1 = arith.constant 0 : i32
    return %c0_i32, %c0_i32_0 : i32, i32
  }
  func.func @transform_9(%arg0: i32) -> (i32, i32) {
    %c0_i32 = arith.constant 0 : i32
    %c0_i32_0 = arith.constant 0 : i32
    %c0_i32_1 = arith.constant 0 : i32
    return %c0_i32, %c0_i32_0 : i32, i32
  }
  func.func @transform_10(%arg0: i32) -> (i32, i32) {
    %c0_i32 = arith.constant 0 : i32
    %c0_i32_0 = arith.constant 0 : i32
    %c0_i32_1 = arith.constant 0 : i32
    return %c0_i32, %c0_i32_0 : i32, i32
  }
  func.func @transform_11(%arg0: i32) -> (i32, i32) {
    %c0_i32 = arith.constant 0 : i32
    %c0_i32_0 = arith.constant 0 : i32
    %c0_i32_1 = arith.constant 0 : i32
    return %c0_i32, %c0_i32_0 : i32, i32
  }
  func.func @transform_12(%arg0: i32) -> (i32, i32) {
    %c0_i32 = arith.constant 0 : i32
    %c0_i32_0 = arith.constant 0 : i32
    return %arg0, %c0_i32 : i32, i32
  }
  func.func @transform_13(%arg0: i32) -> (i32, i32) {
    %c0_i32 = arith.constant 0 : i32
    %c0_i32_0 = arith.constant 0 : i32
    return %arg0, %c0_i32 : i32, i32
  }
}

</mosaic_0001>

<llo_original>
// kernel: tpu_custom_call.1
$region0: #{tpu_custom_call.1}
  #allocation0 [shape = 'u32[]', space=smem, size = 0x4, offset = 0x4, fixed_abs, tag = 'smem constant byte address 0x4 - core index']
  #allocation1 [shape = 'u32[144,128]{1,0:T(1,128)}', space=vmem, size = 0x12000, scoped, tag = 'internal scratch']
  %s0 = inlined_call_operand.hbm [shape: f32[8,32], index: 0, kind: input, shape index: {}]
  %s1 = inlined_call_operand.hbm [shape: f32[8,128], index: 1, kind: input, shape index: {}]
  %s2 = inlined_call_operand.hbm [shape: f32[32,256], index: 2, kind: input, shape index: {}]
  %s3 = inlined_call_operand.vmem [shape: f32[1,256], index: 3, kind: input, shape index: {}]
  %s4 = inlined_call_operand.hbm [shape: f32[256,128], index: 4, kind: input, shape index: {}]
  %s5 = inlined_call_operand.vmem [shape: f32[1,128], index: 5, kind: input, shape index: {}]
  %s6 = inlined_call_operand.hbm [shape: f32[128,128], index: 6, kind: input, shape index: {}]
  %s7 = inlined_call_operand.vmem [shape: f32[1,128], index: 7, kind: input, shape index: {}]
  %s8 = inlined_call_operand.hbm [shape: f32[128,128], index: 8, kind: input, shape index: {}]
  %s9 = inlined_call_operand.vmem [shape: f32[1,128], index: 9, kind: input, shape index: {}]
  %s10 = inlined_call_operand.hbm [shape: f32[128,128], index: 10, kind: input, shape index: {}]
  %s11 = inlined_call_operand.vmem [shape: f32[1,128], index: 11, kind: input, shape index: {}]
  %s12 = inlined_call_operand.hbm [shape: f32[8,128], index: 12, kind: output, shape index: {0}]
  %s13 = inlined_call_operand.hbm [shape: f32[8,128], index: 13, kind: output, shape index: {1}]
  %14 = xla_tuple %s12, %s13
  %s15 = sld [smem:[#allocation0]]
  $region94: #{tpu_custom_call.1} parent=0
    _
  %s17 = ssub.s32 1, %s15
  %s18 = scalar_select 0, %s17, %s15
  $region1: #{tpu_custom_call.1} parent=0
    #allocation2 [shape = 'u8[4096]{0}', space=vmem, size = 0x1000, scoped, tag = 'input window, operand 0, single buffered']
    #allocation3 [shape = 's32[1]{0}', space=sflag, size = 0x4, scoped, tag = 'scoped memory for tpu_custom_call.1']
    #allocation4 [shape = 's32[1]{0}', space=sflag, size = 0x4, scoped, tag = 'scoped memory for tpu_custom_call.1']
    #allocation5 [shape = 'u8[4096]{0}', space=vmem, size = 0x1000, scoped, tag = 'input window, operand 1, single buffered']
    #allocation6 [shape = 's32[1]{0}', space=sflag, size = 0x4, scoped, tag = 'scoped memory for tpu_custom_call.1']
    #allocation7 [shape = 'u8[32768]{0}', space=vmem, size = 0x8000, scoped, tag = 'input window, operand 2, single buffered']
    #allocation8 [shape = 'u8[131072]{0}', space=vmem, size = 0x20000, scoped, tag = 'input window, operand 4, single buffered']
    #allocation9 [shape = 's32[1]{0}', space=sflag, size = 0x4, scoped, tag = 'scoped memory for tpu_custom_call.1']
    #allocation10 [shape = 'u8[65536]{0}', space=vmem, size = 0x10000, scoped, tag = 'input window, operand 6, single buffered']
    #allocation11 [shape = 'u8[65536]{0}', space=vmem, size = 0x10000, scoped, tag = 'input window, operand 8, single buffered']
    #allocation12 [shape = 's32[1]{0}', space=sflag, size = 0x4, scoped, tag = 'scoped memory for tpu_custom_call.1']
    #allocation13 [shape = 'u8[65536]{0}', space=vmem, size = 0x10000, scoped, tag = 'input window, operand 10, single buffered']
    #allocation14 [shape = 'u8[4096]{0}', space=vmem, size = 0x1000, scoped, tag = 'output window, operand 0, single buffered']
    #allocation15 [shape = 'u8[4096]{0}', space=vmem, size = 0x1000, scoped, tag = 'output window, operand 1, single buffered']
    #allocation16 [shape = 's32[1]{0}', space=sflag, size = 0x4, scoped, tag = 'scoped memory for tpu_custom_call.1']
    %19 = vsyncpa [#allocation3], 0
    %20 = vsyncpa [#allocation6], 0
    %21 = vsyncpa [#allocation9], 0
    %22 = vsyncpa [#allocation12], 0
    %23 = vsyncpa [#allocation4], 0
    %24 = vsyncpa [#allocation16], 0
    // Predicated region
    $region2: #{tpu_custom_call.1} parent=1 // pred_check
      _
    $region3: #{tpu_custom_call.1} parent=1 // pred_check_branch
      %26 = sbr.rel (0) target = $region5
    $region4: #{tpu_custom_call.1} parent=1 // pred_region
      %s28 = ssub.s32 128, 128
      %29 = vsyncadd [#allocation3], %s28
      %s31 = sshll.u32 [#allocation2], 4
      %s32 = int_to_ptr.vmem [resolvable:$true] %s31
      %34 = dma.hbm_to_vmem [thread:$0]  %s0, 128, %s32, [#allocation3]
    $region5: #{tpu_custom_call.1} parent=1 // pred_fallthru
      _
    // Predicated region
    $region6: #{tpu_custom_call.1} parent=1 // pred_check
      _
    $region7: #{tpu_custom_call.1} parent=1 // pred_check_branch
      %36 = sbr.rel (0) target = $region9
    $region8: #{tpu_custom_call.1} parent=1 // pred_region
      %s38 = ssub.s32 128, 128
      %39 = vsyncadd [#allocation6], %s38
      %s41 = sshll.u32 [#allocation5], 4
      %s42 = int_to_ptr.vmem [resolvable:$true] %s41
      %44 = dma.hbm_to_vmem [thread:$0]  %s1, 128, %s42, [#allocation6]
    $region9: #{tpu_custom_call.1} parent=1 // pred_fallthru
      _
    // Predicated region
    $region10: #{tpu_custom_call.1} parent=1 // pred_check
      _
    $region11: #{tpu_custom_call.1} parent=1 // pred_check_branch
      %46 = sbr.rel (0) target = $region13
    $region12: #{tpu_custom_call.1} parent=1 // pred_region
      %s48 = ssub.s32 1024, 1024
      %49 = vsyncadd [#allocation6], %s48
      %s50 = sshll.u32 [#allocation7], 4
      %s51 = int_to_ptr.vmem [resolvable:$true] %s50
      %56 = dma.hbm_to_vmem [thread:$0]  %s2, 1024, %s51, [#allocation6], 256, 256, 16
    $region13: #{tpu_custom_call.1} parent=1 // pred_fallthru
      _
    // Predicated region
    $region14: #{tpu_custom_call.1} parent=1 // pred_check
      _
    $region15: #{tpu_custom_call.1} parent=1 // pred_check_branch
      %58 = sbr.rel (0) target = $region17
    $region16: #{tpu_custom_call.1} parent=1 // pred_region
      _
    $region17: #{tpu_custom_call.1} parent=1 // pred_fallthru
      _
    // Predicated region
    $region18: #{tpu_custom_call.1} parent=1 // pred_check
      _
    $region19: #{tpu_custom_call.1} parent=1 // pred_check_branch
      %60 = sbr.rel (0) target = $region21
    $region20: #{tpu_custom_call.1} parent=1 // pred_region
      %s62 = ssub.s32 4096, 4096
      %63 = vsyncadd [#allocation9], %s62
      %s64 = sshll.u32 [#allocation8], 4
      %s65 = int_to_ptr.vmem [resolvable:$true] %s64
      %70 = dma.hbm_to_vmem [thread:$0]  %s4, 4096, %s65, [#allocation9], 128, 128, 8
    $region21: #{tpu_custom_call.1} parent=1 // pred_fallthru
      _
    // Predicated region
    $region22: #{tpu_custom_call.1} parent=1 // pred_check
      _
    $region23: #{tpu_custom_call.1} parent=1 // pred_check_branch
      %72 = sbr.rel (0) target = $region25
    $region24: #{tpu_custom_call.1} parent=1 // pred_region
      _
    $region25: #{tpu_custom_call.1} parent=1 // pred_fallthru
      _
    // Predicated region
    $region26: #{tpu_custom_call.1} parent=1 // pred_check
      _
    $region27: #{tpu_custom_call.1} parent=1 // pred_check_branch
      %74 = sbr.rel (0) target = $region29
    $region28: #{tpu_custom_call.1} parent=1 // pred_region
      %s76 = ssub.s32 2048, 2048
      %77 = vsyncadd [#allocation9], %s76
      %s78 = sshll.u32 [#allocation10], 4
      %s79 = int_to_ptr.vmem [resolvable:$true] %s78
      %84 = dma.hbm_to_vmem [thread:$0]  %s6, 2048, %s79, [#allocation9], 128, 128, 8
    $region29: #{tpu_custom_call.1} parent=1 // pred_fallthru
      _
    // Predicated region
    $region30: #{tpu_custom_call.1} parent=1 // pred_check
      _
    $region31: #{tpu_custom_call.1} parent=1 // pred_check_branch
      %86 = sbr.rel (0) target = $region33
    $region32: #{tpu_custom_call.1} parent=1 // pred_region
      _
    $region33: #{tpu_custom_call.1} parent=1 // pred_fallthru
      _
    // Predicated region
    $region34: #{tpu_custom_call.1} parent=1 // pred_check
      _
    $region35: #{tpu_custom_call.1} parent=1 // pred_check_branch
      %88 = sbr.rel (0) target = $region37
    $region36: #{tpu_custom_call.1} parent=1 // pred_region
      %s90 = ssub.s32 2048, 2048
      %91 = vsyncadd [#allocation12], %s90
      %s92 = sshll.u32 [#allocation11], 4
      %s93 = int_to_ptr.vmem [resolvable:$true] %s92
      %98 = dma.hbm_to_vmem [thread:$0]  %s8, 2048, %s93, [#allocation12], 128, 128, 8
    $region37: #{tpu_custom_call.1} parent=1 // pred_fallthru
      _
    // Predicated region
    $region38: #{tpu_custom_call.1} parent=1 // pred_check
      _
    $region39: #{tpu_custom_call.1} parent=1 // pred_check_branch
      %100 = sbr.rel (0) target = $region41
    $region40: #{tpu_custom_call.1} parent=1 // pred_region
      _
    $region41: #{tpu_custom_call.1} parent=1 // pred_fallthru
      _
    // Predicated region
    $region42: #{tpu_custom_call.1} parent=1 // pred_check
      _
    $region43: #{tpu_custom_call.1} parent=1 // pred_check_branch
      %102 = sbr.rel (0) target = $region45
    $region44: #{tpu_custom_call.1} parent=1 // pred_region
      %s104 = ssub.s32 2048, 2048
      %105 = vsyncadd [#allocation12], %s104
      %s106 = sshll.u32 [#allocation13], 4
      %s107 = int_to_ptr.vmem [resolvable:$true] %s106
      %112 = dma.hbm_to_vmem [thread:$0]  %s10, 2048, %s107, [#allocation12], 128, 128, 8
    $region45: #{tpu_custom_call.1} parent=1 // pred_fallthru
      _
    // Predicated region
    $region46: #{tpu_custom_call.1} parent=1 // pred_check
      _
    $region47: #{tpu_custom_call.1} parent=1 // pred_check_branch
      %114 = sbr.rel (0) target = $region49
    $region48: #{tpu_custom_call.1} parent=1 // pred_region
      _
    $region49: #{tpu_custom_call.1} parent=1 // pred_fallthru
      _
    // Predicated region
    $region50: #{tpu_custom_call.1} parent=1 // pred_check
      _
    $region51: #{tpu_custom_call.1} parent=1 // pred_check_branch
      %116 = sbr.rel (0) target = $region53
    $region52: #{tpu_custom_call.1} parent=1 // pred_region
      %117 = dma.done [#allocation3], 128
    $region53: #{tpu_custom_call.1} parent=1 // pred_fallthru
      _
    // Predicated region
    $region54: #{tpu_custom_call.1} parent=1 // pred_check
      _
    $region55: #{tpu_custom_call.1} parent=1 // pred_check_branch
      %119 = sbr.rel (0) target = $region57
    $region56: #{tpu_custom_call.1} parent=1 // pred_region
      %120 = dma.done [#allocation6], 128
    $region57: #{tpu_custom_call.1} parent=1 // pred_fallthru
      _
    // Predicated region
    $region58: #{tpu_custom_call.1} parent=1 // pred_check
      _
    $region59: #{tpu_custom_call.1} parent=1 // pred_check_branch
      %122 = sbr.rel (0) target = $region61
    $region60: #{tpu_custom_call.1} parent=1 // pred_region
      %123 = dma.done [#allocation6], 1024
    $region61: #{tpu_custom_call.1} parent=1 // pred_fallthru
      _
    // Predicated region
    $region62: #{tpu_custom_call.1} parent=1 // pred_check
      _
    $region63: #{tpu_custom_call.1} parent=1 // pred_check_branch
      %125 = sbr.rel (0) target = $region65
    $region64: #{tpu_custom_call.1} parent=1 // pred_region
      %126 = dma.done [#allocation9], 4096
    $region65: #{tpu_custom_call.1} parent=1 // pred_fallthru
      _
    // Predicated region
    $region66: #{tpu_custom_call.1} parent=1 // pred_check
      _
    $region67: #{tpu_custom_call.1} parent=1 // pred_check_branch
      %128 = sbr.rel (0) target = $region69
    $region68: #{tpu_custom_call.1} parent=1 // pred_region
      %129 = dma.done [#allocation9], 2048
    $region69: #{tpu_custom_call.1} parent=1 // pred_fallthru
      _
    // Predicated region
    $region70: #{tpu_custom_call.1} parent=1 // pred_check
      _
    $region71: #{tpu_custom_call.1} parent=1 // pred_check_branch
      %131 = sbr.rel (0) target = $region73
    $region72: #{tpu_custom_call.1} parent=1 // pred_region
      %132 = dma.done [#allocation12], 2048
    $region73: #{tpu_custom_call.1} parent=1 // pred_fallthru
      _
    // Predicated region
    $region74: #{tpu_custom_call.1} parent=1 // pred_check
      _
    $region75: #{tpu_custom_call.1} parent=1 // pred_check_branch
      %134 = sbr.rel (0) target = $region77
    $region76: #{tpu_custom_call.1} parent=1 // pred_region
      %135 = dma.done [#allocation12], 2048
    $region77: #{tpu_custom_call.1} parent=1 // pred_fallthru
      _
    %v136 = vld [vmem:[#allocation2] sm:$0xff]
    %v137 = vld [vmem:[#allocation5] sm:$0xff]
    %v138 = vld [vmem:[#allocation7] sm:$0xff]
    %v139 = vld [vmem:[#allocation7 + $0x8] sm:$0xff]
    %v140 = vld [vmem:[#allocation7 + $0x10] sm:$0xff]
    %v141 = vld [vmem:[#allocation7 + $0x18] sm:$0xff]
    %v142 = vld [vmem:[#allocation7 + $0x20] sm:$0xff]
    %v143 = vld [vmem:[#allocation7 + $0x28] sm:$0xff]
    %v144 = vld [vmem:[#allocation7 + $0x30] sm:$0xff]
    %v145 = vld [vmem:[#allocation7 + $0x38] sm:$0xff]
    %v146 = vld [vmem:[%s3] sm:$0x3]
    %v148 = vlaneseq
    %v149 = vshrl.u32 %v148, 7
    %v150 = vsub.s32 0, %v149
    %v151 = vrot.slane %v146, %v150
    %v152 = vlaneseq
    %v153 = vshrl.u32 %v152, 7
    %v154 = vsub.s32 1, %v153
    %v155 = vrot.slane %v146, %v154
    %vm158 = vcmask 261120
    %v160 = vsel %vm158, %v136, 0
    %162 = vmatprep.subr.mxu0 %v139
    %163 = vmatpush1.msra.mxu0 %v138
    %164 = vmatprep.subr.mxu0 %v141
    %165 = vmatpush1.msra.mxu0 %v140
    %166 = vmatprep.subr.mxu0 %v143
    %167 = vmatpush1.msra.mxu0 %v142
    %168 = vmatprep.subr.mxu0 %v145
    %169 = vmatpush1.msra.mxu0 %v144
    %170 = vmatprep.subr.mxu0 0.0
    %171 = vmatpush1.msra.mxu0 0.0
    %172 = vmatprep.subr.mxu0 0.0
    %173 = vmatpush1.msra.mxu0 0.0
    %174 = vmatprep.subr.mxu0 0.0
    %175 = vmatpush1.msra.mxu0 0.0
    %176 = vmatprep.subr.mxu0 0.0
    %177 = vmatpush1.msra.mxu0 0.0
    %178 = vmatprep.subr.mxu0 0.0
    %179 = vmatpush1.msra.mxu0 0.0
    %180 = vmatprep.subr.mxu0 0.0
    %181 = vmatpush1.msra.mxu0 0.0
    %182 = vmatprep.subr.mxu0 0.0
    %183 = vmatpush1.msra.mxu0 0.0
    %184 = vmatprep.subr.mxu0 0.0
    %185 = vmatpush1.msra.mxu0 0.0
    %186 = vmatprep.subr.mxu0 0.0
    %187 = vmatpush1.msra.mxu0 0.0
    %188 = vmatprep.subr.mxu0 0.0
    %189 = vmatpush1.msra.mxu0 0.0
    %190 = vmatprep.subr.mxu0 0.0
    %191 = vmatpush1.msra.mxu0 0.0
    %192 = vmatprep.subr.mxu0 0.0
    %193 = vmatpush1.msra.mxu0 0.0
    %194 = vmatprep.subr.mxu0 0.0
    %195 = vmatpush1.msra.mxu0 0.0
    %196 = vmatprep.subr.mxu0 0.0
    %197 = vmatpush1.msra.mxu0 0.0
    %198 = vmatprep.subr.mxu0 0.0
    %199 = vmatpush1.msra.mxu0 0.0
    %200 = vmatprep.subr.mxu0 0.0
    %201 = vmatpush1.msra.mxu0 0.0
    %202 = vmatprep.subr.mxu0 0.0
    %203 = vmatpush1.msra.mxu0 0.0
    %204 = vmatprep.subr.mxu0 0.0
    %205 = vmatpush1.msra.mxu0 0.0
    %206 = vmatprep.subr.mxu0 0.0
    %207 = vmatpush1.msra.mxu0 0.0
    %208 = vmatprep.subr.mxu0 0.0
    %209 = vmatpush1.msra.mxu0 0.0
    %210 = vmatprep.subr.mxu0 0.0
    %211 = vmatpush1.msra.mxu0 0.0
    %212 = vmatprep.subr.mxu0 0.0
    %213 = vmatpush1.msra.mxu0 0.0
    %214 = vmatprep.subr.mxu0 0.0
    %215 = vmatpush1.msra.mxu0 0.0
    %216 = vmatprep.subr.mxu0 0.0
    %217 = vmatpush1.msra.mxu0 0.0
    %218 = vmatprep.subr.mxu0 0.0
    %219 = vmatpush1.msra.mxu0 0.0
    %220 = vmatprep.subr.mxu0 0.0
    %221 = vmatpush1.msra.mxu0 0.0
    %222 = vmatprep.subr.mxu0 0.0
    %223 = vmatpush1.msra.mxu0 0.0
    %224 = vmatprep.subr.mxu0 0.0
    %225 = vmatpush1.msra.mxu0 0.0
    %226 = vmatprep.mubr.f32.mxu0 0.0
    %227 = vmatmul.mubr.f32.gmra.mrb[0].mxu0 %v160
    %v228 = vpop.f32.mrb[0].mxu0
    %v229 = vadd.f32 %v151, %v228
    %v230 = vpop.f32.mrb[0].mxu0
    %v231 = vadd.f32 %v155, %v230
    %232 = vdwg.mxu0
    %v233 = vmax.f32 %v229, 0.0
    %v234 = vmax.f32 %v231, 0.0
    %v235 = vld [vmem:[#allocation8] sm:$0xff]
    %v236 = vld [vmem:[#allocation8 + $0x8] sm:$0xff]
    %v237 = vld [vmem:[#allocation8 + $0x10] sm:$0xff]
    %v238 = vld [vmem:[#allocation8 + $0x18] sm:$0xff]
    %v239 = vld [vmem:[#allocation8 + $0x20] sm:$0xff]
    %v240 = vld [vmem:[#allocation8 + $0x28] sm:$0xff]
    %v241 = vld [vmem:[#allocation8 + $0x30] sm:$0xff]
    %v242 = vld [vmem:[#allocation8 + $0x38] sm:$0xff]
    %v243 = vld [vmem:[#allocation8 + $0x40] sm:$0xff]
    %v244 = vld [vmem:[#allocation8 + $0x48] sm:$0xff]
    %v245 = vld [vmem:[#allocation8 + $0x50] sm:$0xff]
    %v246 = vld [vmem:[#allocation8 + $0x58] sm:$0xff]
    %v247 = vld [vmem:[#allocation8 + $0x60] sm:$0xff]
    %v248 = vld [vmem:[#allocation8 + $0x68] sm:$0xff]
    %v249 = vld [vmem:[#allocation8 + $0x70] sm:$0xff]
    %v250 = vld [vmem:[#allocation8 + $0x78] sm:$0xff]
    %v251 = vld [vmem:[#allocation8 + $0x80] sm:$0xff]
    %v252 = vld [vmem:[#allocation8 + $0x88] sm:$0xff]
    %v253 = vld [vmem:[#allocation8 + $0x90] sm:$0xff]
    %v254 = vld [vmem:[#allocation8 + $0x98] sm:$0xff]
    %v255 = vld [vmem:[#allocation8 + $0xa0] sm:$0xff]
    %v256 = vld [vmem:[#allocation8 + $0xa8] sm:$0xff]
    %v257 = vld [vmem:[#allocation8 + $0xb0] sm:$0xff]
    %v258 = vld [vmem:[#allocation8 + $0xb8] sm:$0xff]
    %v259 = vld [vmem:[#allocation8 + $0xc0] sm:$0xff]
    %v260 = vld [vmem:[#allocation8 + $0xc8] sm:$0xff]
    %v261 = vld [vmem:[#allocation8 + $0xd0] sm:$0xff]
    %v262 = vld [vmem:[#allocation8 + $0xd8] sm:$0xff]
    %v263 = vld [vmem:[#allocation8 + $0xe0] sm:$0xff]
    %v264 = vld [vmem:[#allocation8 + $0xe8] sm:$0xff]
    %v265 = vld [vmem:[#allocation8 + $0xf0] sm:$0xff]
    %v266 = vld [vmem:[#allocation8 + $0xf8] sm:$0xff]
    %v267 = vld [vmem:[%s5] sm:$0x1]
    %v269 = vlaneseq
    %v270 = vshrl.u32 %v269, 7
    %v271 = vsub.s32 0, %v270
    %v272 = vrot.slane %v267, %v271
    %274 = vmatprep.subr.mxu0 0.0
    %275 = vmatpush1.msra.mxu0 %v235
    %276 = vmatprep.subr.mxu0 0.0
    %277 = vmatpush1.msra.mxu0 %v236
    %278 = vmatprep.subr.mxu0 0.0
    %279 = vmatpush1.msra.mxu0 %v237
    %280 = vmatprep.subr.mxu0 0.0
    %281 = vmatpush1.msra.mxu0 %v238
    %282 = vmatprep.subr.mxu0 0.0
    %283 = vmatpush1.msra.mxu0 %v239
    %284 = vmatprep.subr.mxu0 0.0
    %285 = vmatpush1.msra.mxu0 %v240
    %286 = vmatprep.subr.mxu0 0.0
    %287 = vmatpush1.msra.mxu0 %v241
    %288 = vmatprep.subr.mxu0 0.0
    %289 = vmatpush1.msra.mxu0 %v242
    %290 = vmatprep.subr.mxu0 0.0
    %291 = vmatpush1.msra.mxu0 %v243
    %292 = vmatprep.subr.mxu0 0.0
    %293 = vmatpush1.msra.mxu0 %v244
    %294 = vmatprep.subr.mxu0 0.0
    %295 = vmatpush1.msra.mxu0 %v245
    %296 = vmatprep.subr.mxu0 0.0
    %297 = vmatpush1.msra.mxu0 %v246
    %298 = vmatprep.subr.mxu0 0.0
    %299 = vmatpush1.msra.mxu0 %v247
    %300 = vmatprep.subr.mxu0 0.0
    %301 = vmatpush1.msra.mxu0 %v248
    %302 = vmatprep.subr.mxu0 0.0
    %303 = vmatpush1.msra.mxu0 %v249
    %304 = vmatprep.subr.mxu0 0.0
    %305 = vmatpush1.msra.mxu0 %v250
    %306 = vmatprep.subr.mxu0 0.0
    %307 = vmatpush1.msra.mxu0 %v251
    %308 = vmatprep.subr.mxu0 0.0
    %309 = vmatpush1.msra.mxu0 %v252
    %310 = vmatprep.subr.mxu0 0.0
    %311 = vmatpush1.msra.mxu0 %v253
    %312 = vmatprep.subr.mxu0 0.0
    %313 = vmatpush1.msra.mxu0 %v254
    %314 = vmatprep.subr.mxu0 0.0
    %315 = vmatpush1.msra.mxu0 %v255
    %316 = vmatprep.subr.mxu0 0.0
    %317 = vmatpush1.msra.mxu0 %v256
    %318 = vmatprep.subr.mxu0 0.0
    %319 = vmatpush1.msra.mxu0 %v257
    %320 = vmatprep.subr.mxu0 0.0
    %321 = vmatpush1.msra.mxu0 %v258
    %322 = vmatprep.subr.mxu0 0.0
    %323 = vmatpush1.msra.mxu0 %v259
    %324 = vmatprep.subr.mxu0 0.0
    %325 = vmatpush1.msra.mxu0 %v260
    %326 = vmatprep.subr.mxu0 0.0
    %327 = vmatpush1.msra.mxu0 %v261
    %328 = vmatprep.subr.mxu0 0.0
    %329 = vmatpush1.msra.mxu0 %v262
    %330 = vmatprep.subr.mxu0 0.0
    %331 = vmatpush1.msra.mxu0 %v263
    %332 = vmatprep.subr.mxu0 0.0
    %333 = vmatpush1.msra.mxu0 %v264
    %334 = vmatprep.subr.mxu0 0.0
    %335 = vmatpush1.msra.mxu0 %v265
    %336 = vmatprep.subr.mxu0 0.0
    %337 = vmatpush1.msra.mxu0 %v266
    %338 = vmatprep.mubr.f32.mxu0 %v234
    %339 = vmatmul.mubr.f32.gmra.mrb[0].mxu0 %v233
    %v340 = vpop.f32.mrb[0].mxu0
    %v341 = vadd.f32 %v272, %v340
    %v342 = vpop.f32.mrb[0].mxu0
    %343 = vdwg.mxu0
    %344 = vst [vmem:[#allocation15] sm:$0xff] %v341
    %v345 = vadd.f32 %v341, %v137
    %v346 = vld [vmem:[#allocation10] sm:$0xff]
    %v347 = vld [vmem:[#allocation10 + $0x8] sm:$0xff]
    %v348 = vld [vmem:[#allocation10 + $0x10] sm:$0xff]
    %v349 = vld [vmem:[#allocation10 + $0x18] sm:$0xff]
    %v350 = vld [vmem:[#allocation10 + $0x20] sm:$0xff]
    %v351 = vld [vmem:[#allocation10 + $0x28] sm:$0xff]
    %v352 = vld [vmem:[#allocation10 + $0x30] sm:$0xff]
    %v353 = vld [vmem:[#allocation10 + $0x38] sm:$0xff]
    %v354 = vld [vmem:[#allocation10 + $0x40] sm:$0xff]
    %v355 = vld [vmem:[#allocation10 + $0x48] sm:$0xff]
    %v356 = vld [vmem:[#allocation10 + $0x50] sm:$0xff]
    %v357 = vld [vmem:[#allocation10 + $0x58] sm:$0xff]
    %v358 = vld [vmem:[#allocation10 + $0x60] sm:$0xff]
    %v359 = vld [vmem:[#allocation10 + $0x68] sm:$0xff]
    %v360 = vld [vmem:[#allocation10 + $0x70] sm:$0xff]
    %v361 = vld [vmem:[#allocation10 + $0x78] sm:$0xff]
    %v362 = vld [vmem:[%s7] sm:$0x1]
    %v364 = vlaneseq
    %v365 = vshrl.u32 %v364, 7
    %v366 = vsub.s32 0, %v365
    %v367 = vrot.slane %v362, %v366
    %369 = vmatprep.subr.mxu0 0.0
    %370 = vmatpush1.msra.mxu0 %v346
    %371 = vmatprep.subr.mxu0 0.0
    %372 = vmatpush1.msra.mxu0 %v347
    %373 = vmatprep.subr.mxu0 0.0
    %374 = vmatpush1.msra.mxu0 %v348
    %375 = vmatprep.subr.mxu0 0.0
    %376 = vmatpush1.msra.mxu0 %v349
    %377 = vmatprep.subr.mxu0 0.0
    %378 = vmatpush1.msra.mxu0 %v350
    %379 = vmatprep.subr.mxu0 0.0
    %380 = vmatpush1.msra.mxu0 %v351
    %381 = vmatprep.subr.mxu0 0.0
    %382 = vmatpush1.msra.mxu0 %v352
    %383 = vmatprep.subr.mxu0 0.0
    %384 = vmatpush1.msra.mxu0 %v353
    %385 = vmatprep.subr.mxu0 0.0
    %386 = vmatpush1.msra.mxu0 %v354
    %387 = vmatprep.subr.mxu0 0.0
    %388 = vmatpush1.msra.mxu0 %v355
    %389 = vmatprep.subr.mxu0 0.0
    %390 = vmatpush1.msra.mxu0 %v356
    %391 = vmatprep.subr.mxu0 0.0
    %392 = vmatpush1.msra.mxu0 %v357
    %393 = vmatprep.subr.mxu0 0.0
    %394 = vmatpush1.msra.mxu0 %v358
    %395 = vmatprep.subr.mxu0 0.0
    %396 = vmatpush1.msra.mxu0 %v359
    %397 = vmatprep.subr.mxu0 0.0
    %398 = vmatpush1.msra.mxu0 %v360
    %399 = vmatprep.subr.mxu0 0.0
    %400 = vmatpush1.msra.mxu0 %v361
    %401 = vmatprep.subr.mxu0 0.0
    %402 = vmatpush1.msra.mxu0 0.0
    %403 = vmatprep.subr.mxu0 0.0
    %404 = vmatpush1.msra.mxu0 0.0
    %405 = vmatprep.subr.mxu0 0.0
    %406 = vmatpush1.msra.mxu0 0.0
    %407 = vmatprep.subr.mxu0 0.0
    %408 = vmatpush1.msra.mxu0 0.0
    %409 = vmatprep.subr.mxu0 0.0
    %410 = vmatpush1.msra.mxu0 0.0
    %411 = vmatprep.subr.mxu0 0.0
    %412 = vmatpush1.msra.mxu0 0.0
    %413 = vmatprep.subr.mxu0 0.0
    %414 = vmatpush1.msra.mxu0 0.0
    %415 = vmatprep.subr.mxu0 0.0
    %416 = vmatpush1.msra.mxu0 0.0
    %417 = vmatprep.subr.mxu0 0.0
    %418 = vmatpush1.msra.mxu0 0.0
    %419 = vmatprep.subr.mxu0 0.0
    %420 = vmatpush1.msra.mxu0 0.0
    %421 = vmatprep.subr.mxu0 0.0
    %422 = vmatpush1.msra.mxu0 0.0
    %423 = vmatprep.subr.mxu0 0.0
    %424 = vmatpush1.msra.mxu0 0.0
    %425 = vmatprep.subr.mxu0 0.0
    %426 = vmatpush1.msra.mxu0 0.0
    %427 = vmatprep.subr.mxu0 0.0
    %428 = vmatpush1.msra.mxu0 0.0
    %429 = vmatprep.subr.mxu0 0.0
    %430 = vmatpush1.msra.mxu0 0.0
    %431 = vmatprep.subr.mxu0 0.0
    %432 = vmatpush1.msra.mxu0 0.0
    %433 = vmatprep.mubr.f32.mxu0 0.0
    %434 = vmatmul.mubr.f32.gmra.mrb[0].mxu0 %v345
    %v435 = vpop.f32.mrb[0].mxu0
    %v436 = vadd.f32 %v367, %v435
    %v437 = vpop.f32.mrb[0].mxu0
    %438 = vdwg.mxu0
    %v439 = vmax.f32 %v436, 0.0
    %v440 = vld [vmem:[#allocation11] sm:$0xff]
    %v441 = vld [vmem:[#allocation11 + $0x8] sm:$0xff]
    %v442 = vld [vmem:[#allocation11 + $0x10] sm:$0xff]
    %v443 = vld [vmem:[#allocation11 + $0x18] sm:$0xff]
    %v444 = vld [vmem:[#allocation11 + $0x20] sm:$0xff]
    %v445 = vld [vmem:[#allocation11 + $0x28] sm:$0xff]
    %v446 = vld [vmem:[#allocation11 + $0x30] sm:$0xff]
    %v447 = vld [vmem:[#allocation11 + $0x38] sm:$0xff]
    %v448 = vld [vmem:[#allocation11 + $0x40] sm:$0xff]
    %v449 = vld [vmem:[#allocation11 + $0x48] sm:$0xff]
    %v450 = vld [vmem:[#allocation11 + $0x50] sm:$0xff]
    %v451 = vld [vmem:[#allocation11 + $0x58] sm:$0xff]
    %v452 = vld [vmem:[#allocation11 + $0x60] sm:$0xff]
    %v453 = vld [vmem:[#allocation11 + $0x68] sm:$0xff]
    %v454 = vld [vmem:[#allocation11 + $0x70] sm:$0xff]
    %v455 = vld [vmem:[#allocation11 + $0x78] sm:$0xff]
    %v456 = vld [vmem:[%s9] sm:$0x1]
    %v458 = vlaneseq
    %v459 = vshrl.u32 %v458, 7
    %v460 = vsub.s32 0, %v459
    %v461 = vrot.slane %v456, %v460
    %463 = vmatprep.subr.mxu0 0.0
    %464 = vmatpush1.msra.mxu0 %v440
    %465 = vmatprep.subr.mxu0 0.0
    %466 = vmatpush1.msra.mxu0 %v441
    %467 = vmatprep.subr.mxu0 0.0
    %468 = vmatpush1.msra.mxu0 %v442
    %469 = vmatprep.subr.mxu0 0.0
    %470 = vmatpush1.msra.mxu0 %v443
    %471 = vmatprep.subr.mxu0 0.0
    %472 = vmatpush1.msra.mxu0 %v444
    %473 = vmatprep.subr.mxu0 0.0
    %474 = vmatpush1.msra.mxu0 %v445
    %475 = vmatprep.subr.mxu0 0.0
    %476 = vmatpush1.msra.mxu0 %v446
    %477 = vmatprep.subr.mxu0 0.0
    %478 = vmatpush1.msra.mxu0 %v447
    %479 = vmatprep.subr.mxu0 0.0
    %480 = vmatpush1.msra.mxu0 %v448
    %481 = vmatprep.subr.mxu0 0.0
    %482 = vmatpush1.msra.mxu0 %v449
    %483 = vmatprep.subr.mxu0 0.0
    %484 = vmatpush1.msra.mxu0 %v450
    %485 = vmatprep.subr.mxu0 0.0
    %486 = vmatpush1.msra.mxu0 %v451
    %487 = vmatprep.subr.mxu0 0.0
    %488 = vmatpush1.msra.mxu0 %v452
    %489 = vmatprep.subr.mxu0 0.0
    %490 = vmatpush1.msra.mxu0 %v453
    %491 = vmatprep.subr.mxu0 0.0
    %492 = vmatpush1.msra.mxu0 %v454
    %493 = vmatprep.subr.mxu0 0.0
    %494 = vmatpush1.msra.mxu0 %v455
    %495 = vmatprep.subr.mxu0 0.0
    %496 = vmatpush1.msra.mxu0 0.0
    %497 = vmatprep.subr.mxu0 0.0
    %498 = vmatpush1.msra.mxu0 0.0
    %499 = vmatprep.subr.mxu0 0.0
    %500 = vmatpush1.msra.mxu0 0.0
    %501 = vmatprep.subr.mxu0 0.0
    %502 = vmatpush1.msra.mxu0 0.0
    %503 = vmatprep.subr.mxu0 0.0
    %504 = vmatpush1.msra.mxu0 0.0
    %505 = vmatprep.subr.mxu0 0.0
    %506 = vmatpush1.msra.mxu0 0.0
    %507 = vmatprep.subr.mxu0 0.0
    %508 = vmatpush1.msra.mxu0 0.0
    %509 = vmatprep.subr.mxu0 0.0
    %510 = vmatpush1.msra.mxu0 0.0
    %511 = vmatprep.subr.mxu0 0.0
    %512 = vmatpush1.msra.mxu0 0.0
    %513 = vmatprep.subr.mxu0 0.0
    %514 = vmatpush1.msra.mxu0 0.0
    %515 = vmatprep.subr.mxu0 0.0
    %516 = vmatpush1.msra.mxu0 0.0
    %517 = vmatprep.subr.mxu0 0.0
    %518 = vmatpush1.msra.mxu0 0.0
    %519 = vmatprep.subr.mxu0 0.0
    %520 = vmatpush1.msra.mxu0 0.0
    %521 = vmatprep.subr.mxu0 0.0
    %522 = vmatpush1.msra.mxu0 0.0
    %523 = vmatprep.subr.mxu0 0.0
    %524 = vmatpush1.msra.mxu0 0.0
    %525 = vmatprep.subr.mxu0 0.0
    %526 = vmatpush1.msra.mxu0 0.0
    %527 = vmatprep.mubr.f32.mxu0 0.0
    %528 = vmatmul.mubr.f32.gmra.mrb[0].mxu0 %v439
    %v529 = vpop.f32.mrb[0].mxu0
    %v530 = vadd.f32 %v461, %v529
    %v531 = vpop.f32.mrb[0].mxu0
    %532 = vdwg.mxu0
    %v533 = vmax.f32 %v530, 0.0
    %v534 = vld [vmem:[#allocation13] sm:$0xff]
    %v535 = vld [vmem:[#allocation13 + $0x8] sm:$0xff]
    %v536 = vld [vmem:[#allocation13 + $0x10] sm:$0xff]
    %v537 = vld [vmem:[#allocation13 + $0x18] sm:$0xff]
    %v538 = vld [vmem:[#allocation13 + $0x20] sm:$0xff]
    %v539 = vld [vmem:[#allocation13 + $0x28] sm:$0xff]
    %v540 = vld [vmem:[#allocation13 + $0x30] sm:$0xff]
    %v541 = vld [vmem:[#allocation13 + $0x38] sm:$0xff]
    %v542 = vld [vmem:[#allocation13 + $0x40] sm:$0xff]
    %v543 = vld [vmem:[#allocation13 + $0x48] sm:$0xff]
    %v544 = vld [vmem:[#allocation13 + $0x50] sm:$0xff]
    %v545 = vld [vmem:[#allocation13 + $0x58] sm:$0xff]
    %v546 = vld [vmem:[#allocation13 + $0x60] sm:$0xff]
    %v547 = vld [vmem:[#allocation13 + $0x68] sm:$0xff]
    %v548 = vld [vmem:[#allocation13 + $0x70] sm:$0xff]
    %v549 = vld [vmem:[#allocation13 + $0x78] sm:$0xff]
    %v550 = vld [vmem:[%s11] sm:$0x1]
    %v552 = vlaneseq
    %v553 = vshrl.u32 %v552, 7
    %v554 = vsub.s32 0, %v553
    %v555 = vrot.slane %v550, %v554
    %557 = vmatprep.subr.mxu0 0.0
    %558 = vmatpush1.msra.mxu0 %v534
    %559 = vmatprep.subr.mxu0 0.0
    %560 = vmatpush1.msra.mxu0 %v535
    %561 = vmatprep.subr.mxu0 0.0
    %562 = vmatpush1.msra.mxu0 %v536
    %563 = vmatprep.subr.mxu0 0.0
    %564 = vmatpush1.msra.mxu0 %v537
    %565 = vmatprep.subr.mxu0 0.0
    %566 = vmatpush1.msra.mxu0 %v538
    %567 = vmatprep.subr.mxu0 0.0
    %568 = vmatpush1.msra.mxu0 %v539
    %569 = vmatprep.subr.mxu0 0.0
    %570 = vmatpush1.msra.mxu0 %v540
    %571 = vmatprep.subr.mxu0 0.0
    %572 = vmatpush1.msra.mxu0 %v541
    %573 = vmatprep.subr.mxu0 0.0
    %574 = vmatpush1.msra.mxu0 %v542
    %575 = vmatprep.subr.mxu0 0.0
    %576 = vmatpush1.msra.mxu0 %v543
    %577 = vmatprep.subr.mxu0 0.0
    %578 = vmatpush1.msra.mxu0 %v544
    %579 = vmatprep.subr.mxu0 0.0
    %580 = vmatpush1.msra.mxu0 %v545
    %581 = vmatprep.subr.mxu0 0.0
    %582 = vmatpush1.msra.mxu0 %v546
    %583 = vmatprep.subr.mxu0 0.0
    %584 = vmatpush1.msra.mxu0 %v547
    %585 = vmatprep.subr.mxu0 0.0
    %586 = vmatpush1.msra.mxu0 %v548
    %587 = vmatprep.subr.mxu0 0.0
    %588 = vmatpush1.msra.mxu0 %v549
    %589 = vmatprep.subr.mxu0 0.0
    %590 = vmatpush1.msra.mxu0 0.0
    %591 = vmatprep.subr.mxu0 0.0
    %592 = vmatpush1.msra.mxu0 0.0
    %593 = vmatprep.subr.mxu0 0.0
    %594 = vmatpush1.msra.mxu0 0.0
    %595 = vmatprep.subr.mxu0 0.0
    %596 = vmatpush1.msra.mxu0 0.0
    %597 = vmatprep.subr.mxu0 0.0
    %598 = vmatpush1.msra.mxu0 0.0
    %599 = vmatprep.subr.mxu0 0.0
    %600 = vmatpush1.msra.mxu0 0.0
    %601 = vmatprep.subr.mxu0 0.0
    %602 = vmatpush1.msra.mxu0 0.0
    %603 = vmatprep.subr.mxu0 0.0
    %604 = vmatpush1.msra.mxu0 0.0
    %605 = vmatprep.subr.mxu0 0.0
    %606 = vmatpush1.msra.mxu0 0.0
    %607 = vmatprep.subr.mxu0 0.0
    %608 = vmatpush1.msra.mxu0 0.0
    %609 = vmatprep.subr.mxu0 0.0
    %610 = vmatpush1.msra.mxu0 0.0
    %611 = vmatprep.subr.mxu0 0.0
    %612 = vmatpush1.msra.mxu0 0.0
    %613 = vmatprep.subr.mxu0 0.0
    %614 = vmatpush1.msra.mxu0 0.0
    %615 = vmatprep.subr.mxu0 0.0
    %616 = vmatpush1.msra.mxu0 0.0
    %617 = vmatprep.subr.mxu0 0.0
    %618 = vmatpush1.msra.mxu0 0.0
    %619 = vmatprep.subr.mxu0 0.0
    %620 = vmatpush1.msra.mxu0 0.0
    %621 = vmatprep.mubr.f32.mxu0 0.0
    %622 = vmatmul.mubr.f32.gmra.mrb[0].mxu0 %v533
    %v623 = vpop.f32.mrb[0].mxu0
    %v624 = vadd.f32 %v555, %v623
    %v625 = vpop.f32.mrb[0].mxu0
    %626 = vdwg.mxu0
    %627 = vst [vmem:[#allocation14] sm:$0xff] %v624
    // Predicated region
    $region78: #{tpu_custom_call.1} parent=1 // pred_check
      _
    $region79: #{tpu_custom_call.1} parent=1 // pred_check_branch
      %629 = sbr.rel (0) target = $region81
    $region80: #{tpu_custom_call.1} parent=1 // pred_region
      %s631 = ssub.s32 128, 128
      %632 = vsyncadd [#allocation4], %s631
      %s634 = sshll.u32 [#allocation14], 4
      %s635 = int_to_ptr.vmem [resolvable:$true] %s634
      %637 = dma.vmem_to_hbm [thread:$0]  %s635, 128, %s12, [#allocation4]
    $region81: #{tpu_custom_call.1} parent=1 // pred_fallthru
      _
    // Predicated region
    $region82: #{tpu_custom_call.1} parent=1 // pred_check
      _
    $region83: #{tpu_custom_call.1} parent=1 // pred_check_branch
      %639 = sbr.rel (0) target = $region85
    $region84: #{tpu_custom_call.1} parent=1 // pred_region
      %s641 = ssub.s32 128, 128
      %642 = vsyncadd [#allocation16], %s641
      %s644 = sshll.u32 [#allocation15], 4
      %s645 = int_to_ptr.vmem [resolvable:$true] %s644
      %647 = dma.vmem_to_hbm [thread:$0]  %s645, 128, %s13, [#allocation16]
    $region85: #{tpu_custom_call.1} parent=1 // pred_fallthru
      _
    // Predicated region
    $region86: #{tpu_custom_call.1} parent=1 // pred_check
      _
    $region87: #{tpu_custom_call.1} parent=1 // pred_check_branch
      %649 = sbr.rel (0) target = $region89
    $region88: #{tpu_custom_call.1} parent=1 // pred_region
      %650 = dma.done [#allocation4], 128
    $region89: #{tpu_custom_call.1} parent=1 // pred_fallthru
      _
    // Predicated region
    $region90: #{tpu_custom_call.1} parent=1 // pred_check
      _
    $region91: #{tpu_custom_call.1} parent=1 // pred_check_branch
      %652 = sbr.rel (0) target = $region93
    $region92: #{tpu_custom_call.1} parent=1 // pred_region
      %653 = dma.done [#allocation16], 128
    $region93: #{tpu_custom_call.1} parent=1 // pred_fallthru
      _
    %654 = vsyncpa [#allocation3], 1
    %655 = vsyncpa [#allocation6], 1
    %656 = vsyncpa [#allocation9], 1
    %657 = vsyncpa [#allocation12], 1
    %658 = vsyncpa [#allocation4], 1
    %659 = vsyncpa [#allocation16], 1

</llo_original>
